<compile_context>
chip_gen: v6e
topology: v6e:2x2x1
jax: 0.10.0
libtpu: 0.0.40
codegen_flags: <defaults>
</compile_context>

<pallas_src>
import math

import jax
import jax.numpy as jnp
from jax.experimental import pallas as pl
from jax.experimental.pallas import tpu as pltpu


# ----------------------------- Pallas kernel --------------------------------

def pre_kernel(x_ref, pe_ref, o_ref):
    # x_ref : (1, C, L) one flattened image
    # pe_ref: (C, L)    positional-encoding table (resident across grid steps)
    # o_ref : (1, C, L)
    o_ref[0] = (x_ref[0] + pe_ref[...]).astype(o_ref.dtype)


# ----------------------------- parameter setup -------------------------------

def make_pe_table(hdim, max_len=5000):
    """Standard sinusoidal PE buffer, returned transposed as (hdim, max_len)."""
    assert hdim % 2 == 0, "sinusoidal PE assumes an even channel count"
    pos = jnp.arange(max_len, dtype=jnp.float32)[:, None]              # (L, 1)
    div = jnp.exp(jnp.arange(0, hdim, 2, dtype=jnp.float32)
                  * (-math.log(10000.0) / hdim))                       # (hdim/2,)
    ang = pos * div                                                    # (L, hdim/2)
    pe = jnp.zeros((max_len, hdim), jnp.float32)
    pe = pe.at[:, 0::2].set(jnp.sin(ang))
    pe = pe.at[:, 1::2].set(jnp.cos(ang))
    return pe.T                                                        # (hdim, max_len)


# ----------------------------- wrapper ---------------------------------------

def pre_forward(x_nchw, pe_t, window=4):
    """x_nchw: (B, C, H, W) in NCHW;  pe_t: (C, max_len) precomputed PE buffer."""
    b, c, h, w0 = x_nchw.shape
    exceed = w0 % window
    if exceed:
        # rare path; matches nn.functional.pad(x, (0, window - exceed, 0, 0))
        x_nchw = jnp.pad(x_nchw, ((0, 0), (0, 0), (0, 0), (0, window - exceed)))
    w = x_nchw.shape[3]
    L = h * w
    x_flat = x_nchw.reshape(b, c, L)        # contiguous -> free reshape in XLA
    pe = pe_t[:, :L].astype(x_flat.dtype)   # (C, L)

    out = pl.pallas_call(
        pre_kernel,
        out_shape=jax.ShapeDtypeStruct((b, c, L), x_flat.dtype),
        grid_spec=pltpu.PrefetchScalarGridSpec(
            num_scalar_prefetch=0,
            grid=(b,),
            in_specs=[
                pl.BlockSpec((1, c, L), lambda n: (n, 0, 0)),
                pl.BlockSpec((c, L), lambda n: (0, 0)),
            ],
            out_specs=pl.BlockSpec((1, c, L), lambda n: (n, 0, 0)),
        ),
        compiler_params=pltpu.CompilerParams(
            dimension_semantics=("parallel",)),
    )(x_flat, pe)

    return out.reshape(b, c, h, w)


# ----------------------------- pure-JAX reference ----------------------------

def ref_pre(x_nchw, pe_t, window=4):
    """Literal translation of Pre.forward for correctness checking."""
    b, c, h, w0 = x_nchw.shape
    exceed = w0 % window
    if exceed:
        x_nchw = jnp.pad(x_nchw, ((0, 0), (0, 0), (0, 0), (0, window - exceed)))
    b, c, h, w = x_nchw.shape
    L = h * w
    xs = jnp.transpose(x_nchw.reshape(b, c, L), (2, 0, 1))   # (L, B, C)
    xs = xs + jnp.transpose(pe_t[:, :L])[:, None, :]          # + pe[:L]
    return jnp.transpose(xs, (1, 2, 0)).reshape(b, c, h, w)


# ----------------------------- demo / self-test -------------------------------

if __name__ == "__main__":
    B, C, H, W = 2, 4, 16, 16
    window = 4

    key = jax.random.PRNGKey(0)
    k1, k2 = jax.random.split(key)

    pe_t = make_pe_table(C, max_len=5000)

    # main case: W already a multiple of window (no padding branch)
    x = jax.random.normal(k1, (B, C, H, W), jnp.float32)
    out = jax.block_until_ready(pre_forward(x, pe_t, window))
    ref = ref_pre(x, pe_t, window)
    err = float(jnp.max(jnp.abs(out - ref)))
    assert out.shape == (B, C, H, W), f"bad shape {out.shape}"
    assert err < 1e-5, f"mismatch vs reference: {err}"

    # padding branch: W = 14 -> right-padded to 16
    x2 = jax.random.normal(k2, (B, C, H, 14), jnp.float32)
    out2 = jax.block_until_ready(pre_forward(x2, pe_t, window))
    ref2 = ref_pre(x2, pe_t, window)
    err2 = float(jnp.max(jnp.abs(out2 - ref2)))
    assert out2.shape == (B, C, H, 16), f"bad padded shape {out2.shape}"
    assert err2 < 1e-5, f"padded-path mismatch vs reference: {err2}"

    print("KERNEL_OK")
</pallas_src>

<mosaic_0001>
module attributes {stable_mosaic.version = 11 : i64} {
  func.func @pre_kernel(%arg0: i32, %arg1: memref<1x4x256xf32, #tpu.memory_space<vmem>>, %arg2: memref<4x256xf32, #tpu.memory_space<vmem>>, %arg3: memref<1x4x256xf32, #tpu.memory_space<vmem>>) attributes {dimension_semantics = [#tpu.dimension_semantics<parallel>], iteration_bounds = array<i64: 2>, scalar_prefetch = 0 : i64, scratch_operands = 0 : i64, tpu.core_type = #tpu.core_type<tc>, window_params = [{transform_indices = @transform_0, window_bounds = array<i64: 1, 4, 256>}, {pipeline_mode = #tpu.pipeline_mode<synchronous>, transform_indices = @transform_1, window_bounds = array<i64: 4, 256>}, {transform_indices = @transform_2, window_bounds = array<i64: 1, 4, 256>}]} {
    %c0 = arith.constant 0 : index
    %c0_0 = arith.constant 0 : index
    %c0_1 = arith.constant 0 : index
    %0 = vector.load %arg1[%c0, %c0_0, %c0_1] : memref<1x4x256xf32, #tpu.memory_space<vmem>>, vector<1x4x256xf32>
    %1 = vector.shape_cast %0 : vector<1x4x256xf32> to vector<4x256xf32>
    %c0_2 = arith.constant 0 : index
    %c0_3 = arith.constant 0 : index
    %2 = vector.load %arg2[%c0_2, %c0_3] : memref<4x256xf32, #tpu.memory_space<vmem>>, vector<4x256xf32>
    %3 = arith.addf %1, %2 : vector<4x256xf32>
    %c0_4 = arith.constant 0 : index
    %c0_5 = arith.constant 0 : index
    %c0_6 = arith.constant 0 : index
    %4 = vector.load %arg3[%c0_4, %c0_5, %c0_6] : memref<1x4x256xf32, #tpu.memory_space<vmem>>, vector<1x4x256xf32>
    %5 = vector.shape_cast %4 : vector<1x4x256xf32> to vector<4x256xf32>
    %6 = vector.shape_cast %3 : vector<4x256xf32> to vector<1x4x256xf32>
    tpu.vector_store %arg3[%c0_4, %c0_5, %c0_6], %6 {strides = array<i32>} : memref<1x4x256xf32, #tpu.memory_space<vmem>>, vector<1x4x256xf32>,
    return
  }
  func.func @transform_0(%arg0: i32) -> (i32, i32, i32) {
    %c0_i32 = arith.constant 0 : i32
    %c0_i32_0 = arith.constant 0 : i32
    %c0_i32_1 = arith.constant 0 : i32
    return %arg0, %c0_i32, %c0_i32_0 : i32, i32, i32
  }
  func.func @transform_1(%arg0: i32) -> (i32, i32) {
    %c0_i32 = arith.constant 0 : i32
    %c0_i32_0 = arith.constant 0 : i32
    %c0_i32_1 = arith.constant 0 : i32
    return %c0_i32, %c0_i32_0 : i32, i32
  }
  func.func @transform_2(%arg0: i32) -> (i32, i32, i32) {
    %c0_i32 = arith.constant 0 : i32
    %c0_i32_0 = arith.constant 0 : i32
    %c0_i32_1 = arith.constant 0 : i32
    return %arg0, %c0_i32, %c0_i32_0 : i32, i32, i32
  }
}

</mosaic_0001>

<llo_original>
// kernel: tpu_custom_call.1
$region0: #{tpu_custom_call.1}
  #allocation0 [shape = 'u32[]', space=smem, size = 0x4, offset = 0x4, fixed_abs, tag = 'smem constant byte address 0x4 - core index']
  #allocation1 [shape = 'u32[144,128]{1,0:T(1,128)}', space=vmem, size = 0x12000, scoped, tag = 'internal scratch']
  %s0 = inlined_call_operand.hbm [shape: f32[2,4,256], index: 0, kind: input, shape index: {}]
  %s1 = inlined_call_operand.hbm [shape: f32[4,256], index: 1, kind: input, shape index: {}]
  %s2 = inlined_call_operand.hbm [shape: f32[2,4,256], index: 2, kind: output, shape index: {}]
  %s3 = sld [smem:[#allocation0]]
  $region49: #{tpu_custom_call.1} parent=0
    _
  %s5 = ssub.s32 1, %s3
  %s6 = scalar_select 0, %s5, %s3
  $region1: #{tpu_custom_call.1} parent=0
    #allocation2 [shape = 'u8[8192]{0}', space=vmem, size = 0x2000, scoped, tag = 'input window, operand 0']
    #allocation3 [shape = 's32[2]{0}', space=sflag, size = 0x8, scoped, tag = 'scoped memory for tpu_custom_call.1']
    #allocation4 [shape = 's32[2]{0}', space=sflag, size = 0x8, scoped, tag = 'scoped memory for tpu_custom_call.1']
    #allocation5 [shape = 'u8[4096]{0}', space=vmem, size = 0x1000, scoped, tag = 'input window, operand 1, single buffered']
    #allocation6 [shape = 's32[1]{0}', space=sflag, size = 0x4, scoped, tag = 'scoped memory for tpu_custom_call.1']
    #allocation7 [shape = 'u8[8192]{0}', space=vmem, size = 0x2000, scoped, tag = 'output window, operand 0']
    %7 = vsyncpa [#allocation3], 0
    %s8 = scalar_lea.sflag [#allocation3], 1
    %9 = vsyncpa %s8, 0
    %10 = vsyncpa [#allocation6], 0
    %11 = vsyncpa [#allocation4], 0
    %s12 = scalar_lea.sflag [#allocation4], 1
    %13 = vsyncpa %s12, 0
    loop: start=0, step=1, limit=4
    $region2: #{tpu_custom_call.1} parent=1 // loop_pre_header
      _
    $region3: #{tpu_custom_call.1} parent=1 // loop_header
      %s15 = sphi 0, %s19
      %p16 = scmp.ge.s32.totalorder %s15, 4
      %s25 = sphi 0, %s27
      %s28 = sphi 0, %s25
      %s29 = sphi 0, %s28
      %s45 = sphi 0, %s29
      %s49 = sphi 0, %s49
      %s51 = sphi 0, %s49
      %s52 = sphi 0, %s51
      %s66 = sphi 0, %s52
      %s72 = sphi 0, %s74
      %s75 = sphi 0, %s72
      %s76 = sphi 0, %s75
      %s92 = sphi 0, %s76
    $region4: #{tpu_custom_call.1} parent=1 // loop_header_branch
      %18 = sbr.rel (%p16) target = $region8
    $region5: #{tpu_custom_call.1} parent=1 // loop_body
      %s20 = ssub.s32 %s15, 1
      %s21 = ssub.s32 %s15, 2
      %s22 = sadd.s32 %s15, 1
      %s23 = ssub.s32 %s15, %s22
      %p24 = scmp.eq.s32.totalorder %s23, 0
      %s26 = sadd.s32 %s25, 1
      %s27 = scalar_select %p24, %s25, %s26
      %p30 = pneg %p24
      %p31 = scmp.eq.s32.totalorder %s15, 1
      %p32 = por %p30, %p31
      %p33 = scmp.ne.s32.totalorder %s25, %s28
      %p34 = scmp.eq.s32.totalorder %s15, 0
      %p35 = por %p33, %p34
      %p36 = scmp.ne.s32.totalorder %s25, %s28
      %p37 = scmp.eq.s32.totalorder %s20, 1
      %p38 = por %p36, %p37
      %p39 = scmp.ne.s32.totalorder %s28, %s29
      %p40 = scmp.eq.s32.totalorder %s20, 0
      %p41 = por %p39, %p40
      %p42 = scmp.ne.s32.totalorder %s28, %s29
      %p43 = scmp.eq.s32.totalorder %s21, 1
      %p44 = por %p42, %p43
      %p46 = scmp.ne.s32.totalorder %s29, %s45
      %p47 = scmp.eq.s32.totalorder %s21, 0
      %p48 = por %p46, %p47
      %s50 = sadd.s32 %s49, 1
      %p53 = scmp.eq.s32.totalorder %s15, 1
      %p54 = scmp.ne.s32.totalorder %s49, %s51
      %p55 = scmp.eq.s32.totalorder %s15, 0
      %p56 = por %p54, %p55
      %p57 = scmp.ne.s32.totalorder %s49, %s51
      %p58 = scmp.eq.s32.totalorder %s20, 1
      %p59 = por %p57, %p58
      %p60 = scmp.ne.s32.totalorder %s51, %s52
      %p61 = scmp.eq.s32.totalorder %s20, 0
      %p62 = por %p60, %p61
      %p63 = scmp.ne.s32.totalorder %s51, %s52
      %p64 = scmp.eq.s32.totalorder %s21, 1
      %p65 = por %p63, %p64
      %p67 = scmp.ne.s32.totalorder %s52, %s66
      %p68 = scmp.eq.s32.totalorder %s21, 0
      %p69 = por %p67, %p68
      %s70 = ssub.s32 %s15, %s22
      %p71 = scmp.eq.s32.totalorder %s70, 0
      %s73 = sadd.s32 %s72, 1
      %s74 = scalar_select %p71, %s72, %s73
      %p77 = pneg %p71
      %p78 = scmp.eq.s32.totalorder %s15, 1
      %p79 = por %p77, %p78
      %p80 = scmp.ne.s32.totalorder %s72, %s75
      %p81 = scmp.eq.s32.totalorder %s15, 0
      %p82 = por %p80, %p81
      %p83 = scmp.ne.s32.totalorder %s72, %s75
      %p84 = scmp.eq.s32.totalorder %s20, 1
      %p85 = por %p83, %p84
      %p86 = scmp.ne.s32.totalorder %s75, %s76
      %p87 = scmp.eq.s32.totalorder %s20, 0
      %p88 = por %p86, %p87
      %p89 = scmp.ne.s32.totalorder %s75, %s76
      %p90 = scmp.eq.s32.totalorder %s21, 1
      %p91 = por %p89, %p90
      %p93 = scmp.ne.s32.totalorder %s76, %s92
      %p94 = scmp.eq.s32.totalorder %s21, 0
      %p95 = por %p93, %p94
      %p96 = scmp.le.s32.totalorder 1, %s15
      %p97 = scmp.lt.s32.totalorder %s15, 3
      %p98 = pnand %p96, %p97
      %p99 = pneg %p98
      // Predicated region
      $region9: #{tpu_custom_call.1} parent=5 // pred_check
        _
      $region10: #{tpu_custom_call.1} parent=5 // pred_check_branch
        %101 = sbr.rel (%p98) target = $region12
      $region11: #{tpu_custom_call.1} parent=5 // pred_region
        %s102 = ssub.s32 %s15, 1
        // Predicated region
        $region13: #{tpu_custom_call.1} parent=11 // pred_check
          %p103 = pneg %p62
        $region14: #{tpu_custom_call.1} parent=11 // pred_check_branch
          %105 = sbr.rel (%p103) target = $region16
        $region15: #{tpu_custom_call.1} parent=11 // pred_region
          %s107 = ssub.s32 128, 128
          %108 = vsyncadd [#allocation6], %s107
          %s110 = sshll.u32 [#allocation5], 4
          %s111 = int_to_ptr.vmem [resolvable:$true] %s110
          %113 = dma.hbm_to_vmem [thread:$0]  %s1, 128, %s111, [#allocation6]
        $region16: #{tpu_custom_call.1} parent=11 // pred_fallthru
          _
      $region12: #{tpu_custom_call.1} parent=5 // pred_fallthru
        _
      %p114 = scmp.lt.s32.totalorder %s15, 2
      // Predicated region
      $region17: #{tpu_custom_call.1} parent=5 // pred_check
        %p115 = pneg %p114
      $region18: #{tpu_custom_call.1} parent=5 // pred_check_branch
        %117 = sbr.rel (%p115) target = $region20
      $region19: #{tpu_custom_call.1} parent=5 // pred_region
        // Predicated region
        $region21: #{tpu_custom_call.1} parent=19 // pred_check
          %p118 = pneg %p35
        $region22: #{tpu_custom_call.1} parent=19 // pred_check_branch
          %120 = sbr.rel (%p118) target = $region24
        $region23: #{tpu_custom_call.1} parent=19 // pred_region
          %s121 = sand.u32 %s25, 1
          %s122 = scalar_lea.sflag [#allocation3], %s121
          %s123 = sand.u32 %s25, 1
          %s124 = smul.addr %s123, 8
          %s125 = scalar_lea.vmem [#allocation2], %s124
          %s127 = ssub.s32 128, 128
          %128 = vsyncadd %s122, %s127
          %s129 = smul.addr %s15, 2
          %s130 = smul.addr %s129, 64
          %s131 = scalar_lea.hbm %s0, %s130
          %s133 = sshll.u32 %s125, 4
          %s134 = int_to_ptr.vmem [resolvable:$true] %s133
          %136 = dma.hbm_to_vmem [thread:$0]  %s131, 128, %s134, %s122
        $region24: #{tpu_custom_call.1} parent=19 // pred_fallthru
          _
      $region20: #{tpu_custom_call.1} parent=5 // pred_fallthru
        _
      %p137 = scmp.le.s32.totalorder 1, %s15
      %p138 = scmp.lt.s32.totalorder %s15, 3
      %p139 = pnand %p137, %p138
      %p140 = pneg %p139
      // Predicated region
      $region25: #{tpu_custom_call.1} parent=5 // pred_check
        _
      $region26: #{tpu_custom_call.1} parent=5 // pred_check_branch
        %142 = sbr.rel (%p139) target = $region28
      $region27: #{tpu_custom_call.1} parent=5 // pred_region
        %s143 = ssub.s32 %s15, 1
        %s144 = sand.u32 %s28, 1
        %s145 = scalar_lea.sflag [#allocation3], %s144
        %s146 = sand.u32 %s28, 1
        %s147 = smul.addr %s146, 8
        %s148 = scalar_lea.vmem [#allocation2], %s147
        // Predicated region
        $region29: #{tpu_custom_call.1} parent=27 // pred_check
          %p149 = pneg %p41
        $region30: #{tpu_custom_call.1} parent=27 // pred_check_branch
          %151 = sbr.rel (%p149) target = $region32
        $region31: #{tpu_custom_call.1} parent=27 // pred_region
          %152 = dma.done %s145, 128
        $region32: #{tpu_custom_call.1} parent=27 // pred_fallthru
          _
        // Predicated region
        $region33: #{tpu_custom_call.1} parent=27 // pred_check
          %p153 = pneg %p62
        $region34: #{tpu_custom_call.1} parent=27 // pred_check_branch
          %155 = sbr.rel (%p153) target = $region36
        $region35: #{tpu_custom_call.1} parent=27 // pred_region
          %156 = dma.done [#allocation6], 128
        $region36: #{tpu_custom_call.1} parent=27 // pred_fallthru
          _
        %s157 = sand.u32 %s28, 1
        %s158 = scalar_lea.sflag [#allocation3], %s157
        %s159 = sand.u32 %s28, 1
        %s160 = smul.addr %s159, 8
        %s161 = scalar_lea.vmem [#allocation2], %s160
        %p162 = pneg %p41
        %p163 = pneg %p38
        %p164 = pneg %p62
        %p165 = pneg %p59
        %p166 = pneg %p88
        %p167 = pneg %p85
        %s168 = sand.u32 %s75, 1
        %s169 = scalar_lea.sflag [#allocation4], %s168
        %s170 = sand.u32 %s75, 1
        %s171 = smul.addr %s170, 8
        %s172 = scalar_lea.vmem [#allocation7], %s171
        %v173 = vld [vmem:[%s148] sm:$0xff]
        %v174 = vld [vmem:[#allocation5] sm:$0xff]
        %v175 = vadd.f32 %v173, %v174
        %176 = vst [vmem:[%s172] sm:$0xff] %v175
        %s177 = sand.u32 %s75, 1
        %s178 = scalar_lea.sflag [#allocation4], %s177
        %s179 = sand.u32 %s75, 1
        %s180 = smul.addr %s179, 8
        %s181 = scalar_lea.vmem [#allocation7], %s180
        // Predicated region
        $region37: #{tpu_custom_call.1} parent=27 // pred_check
          %p182 = pneg %p85
        $region38: #{tpu_custom_call.1} parent=27 // pred_check_branch
          %184 = sbr.rel (%p182) target = $region40
        $region39: #{tpu_custom_call.1} parent=27 // pred_region
          %s186 = ssub.s32 128, 128
          %187 = vsyncadd %s178, %s186
          %s188 = smul.addr %s20, 2
          %s189 = smul.addr %s188, 64
          %s190 = scalar_lea.hbm %s2, %s189
          %s192 = sshll.u32 %s181, 4
          %s193 = int_to_ptr.vmem [resolvable:$true] %s192
          %195 = dma.vmem_to_hbm [thread:$0]  %s193, 128, %s190, %s178
        $region40: #{tpu_custom_call.1} parent=27 // pred_fallthru
          _
      $region28: #{tpu_custom_call.1} parent=5 // pred_fallthru
        _
      %p196 = scmp.le.s32.totalorder 2, %s15
      // Predicated region
      $region41: #{tpu_custom_call.1} parent=5 // pred_check
        %p197 = pneg %p196
      $region42: #{tpu_custom_call.1} parent=5 // pred_check_branch
        %199 = sbr.rel (%p197) target = $region44
      $region43: #{tpu_custom_call.1} parent=5 // pred_region
        %s200 = ssub.s32 %s15, 2
        // Predicated region
        $region45: #{tpu_custom_call.1} parent=43 // pred_check
          %p201 = pneg %p91
        $region46: #{tpu_custom_call.1} parent=43 // pred_check_branch
          %203 = sbr.rel (%p201) target = $region48
        $region47: #{tpu_custom_call.1} parent=43 // pred_region
          %s204 = sand.u32 %s76, 1
          %s205 = scalar_lea.sflag [#allocation4], %s204
          %s206 = sand.u32 %s76, 1
          %s207 = smul.addr %s206, 8
          %s208 = scalar_lea.vmem [#allocation7], %s207
          %209 = dma.done %s205, 128
        $region48: #{tpu_custom_call.1} parent=43 // pred_fallthru
          _
      $region44: #{tpu_custom_call.1} parent=5 // pred_fallthru
        _
    $region6: #{tpu_custom_call.1} parent=1 // loop_footer
      %s19 = sadd.s32 1, %s15
    $region7: #{tpu_custom_call.1} parent=1 // loop_footer_branch
      %14 = sbr.rel target = $region3
    $region8: #{tpu_custom_call.1} parent=1 // loop_exit
      _
    %210 = vsyncpa [#allocation3], 1
    %s211 = scalar_lea.sflag [#allocation3], 1
    %212 = vsyncpa %s211, 1
    %213 = vsyncpa [#allocation6], 1
    %214 = vsyncpa [#allocation4], 1
    %s215 = scalar_lea.sflag [#allocation4], 1
    %216 = vsyncpa %s215, 1

</llo_original>
